<compile_context>
chip_gen: v6e
topology: v6e:2x2x1
jax: 0.10.0
libtpu: 0.0.40
codegen_flags: <defaults>
</compile_context>

<pallas_src>
import functools

import jax
import jax.numpy as jnp
import numpy as np
from jax.experimental import pallas as pl
from jax.experimental.pallas import tpu as pltpu


def _round_up(a, b):
    return (a + b - 1) // b * b


def _masked_conv1d_kernel(w_ref, b_ref, xm_ref, xh_ref, o_ref, col_ref, *,
                          K, C_in, TL):
    """One (batch n, length-tile j) grid step.

    w_ref:   (C_out, K*C_in)  mask-premultiplied weights, column k*C_in + c
                              corresponds to weight[:, c, k]   (compute dtype)
    b_ref:   (C_out, 1)       f32 bias
    xm_ref:  (1, C_in, TL)    padded-input columns [j*TL, j*TL + TL)
    xh_ref:  (1, 1, C_in, H)  right halo: padded-input cols [(j+1)*TL, ..+K-1)
    o_ref:   (1, C_out, TL)   output tile
    col_ref: (K*C_in, TL)     VMEM im2col scratch
    """
    # Build the im2col slab: row-block k holds the input shifted left by k taps.
    col_ref[0:C_in, :] = xm_ref[0]
    for k in range(1, K):                      # K is small & static -> unrolled
        col_ref[k * C_in:(k + 1) * C_in, 0:TL - k] = xm_ref[0, :, k:TL]
        col_ref[k * C_in:(k + 1) * C_in, TL - k:TL] = xh_ref[0, 0, :, 0:k]
    # Single fused MXU matmul over the full K*C_in contraction, f32 accumulation.
    acc = jnp.dot(w_ref[...], col_ref[...], preferred_element_type=jnp.float32)
    o_ref[0] = (acc + b_ref[...]).astype(o_ref.dtype)


def efficient_masked_conv1d(x, weight, mask, bias, kernel_size,
                            compute_dtype=jnp.bfloat16,
                            vmem_budget_bytes=24 * 1024 * 1024):
    """x: (N, C_in, L); weight: (C_out, C_in, K); mask: (C_out, C_in) or None;
    bias: (C_out,) or None.  Returns (N, C_out, L) with 'same' zero padding."""
    N, C_in, L = x.shape
    C_out = weight.shape[0]
    K = int(kernel_size)
    out_dtype = x.dtype

    total_pad = K - 1
    left_pad = total_pad // 2
    right_pad = total_pad - left_pad
    H = max(K - 1, 1)

    cbytes = jnp.dtype(compute_dtype).itemsize
    obytes = jnp.dtype(out_dtype).itemsize

    def vmem_need(tl):
        return (2 * C_in * tl * cbytes          # x_main (double-buffered)
                + 2 * C_out * tl * obytes       # output (double-buffered)
                + K * C_in * tl * cbytes        # im2col scratch
                + 2 * (K * C_in * C_out * cbytes + C_in * H * cbytes + C_out * 4))

    # Lane-dense length tile: multiple of 128, sized against an explicit VMEM
    # budget (v7x-safe); large L keeps per-step tiles <= 2048 columns.
    TL = min(2048, _round_up(max(L, 1), 128))
    while TL > 128 and vmem_need(TL) > vmem_budget_bytes:
        TL = _round_up(TL // 2, 128)
    L_t = _round_up(L, TL)
    num_tiles = L_t // TL

    # Mask-premultiplied, tap-fused weight (C_out, K*C_in) in compute dtype.
    w = weight if mask is None else weight * mask[:, :, None]
    w_fused = jnp.transpose(w, (0, 2, 1)).reshape(C_out, K * C_in)
    w_fused = w_fused.astype(compute_dtype)
    b = jnp.zeros((C_out,), jnp.float32) if bias is None else bias
    b2d = b.astype(jnp.float32).reshape(C_out, 1)

    # Single fused zero-pad of the activation: conv halo + round L up to TL.
    xc = x.astype(compute_dtype)
    x_pad = jnp.pad(xc, ((0, 0), (0, 0), (left_pad, (L_t - L) + right_pad)))
    x_main = x_pad[:, :, :L_t]                                    # (N, C_in, L_t)
    if K > 1:
        cols = (jnp.arange(1, num_tiles + 1)[:, None] * TL
                + jnp.arange(K - 1)[None, :])                     # (T, K-1)
        x_halo = jnp.transpose(x_pad[:, :, cols], (0, 2, 1, 3))   # (N, T, C_in, K-1)
    else:
        x_halo = jnp.zeros((N, num_tiles, C_in, H), compute_dtype)

    kernel = functools.partial(_masked_conv1d_kernel, K=K, C_in=C_in, TL=TL)

    out = pl.pallas_call(
        kernel,
        out_shape=jax.ShapeDtypeStruct((N, C_out, L_t), out_dtype),
        grid_spec=pltpu.PrefetchScalarGridSpec(
            num_scalar_prefetch=0,
            grid=(N, num_tiles),
            in_specs=[
                pl.BlockSpec((C_out, K * C_in), lambda n, j: (0, 0)),
                pl.BlockSpec((C_out, 1), lambda n, j: (0, 0)),
                pl.BlockSpec((1, C_in, TL), lambda n, j: (n, 0, j)),
                pl.BlockSpec((1, 1, C_in, H), lambda n, j: (n, j, 0, 0)),
            ],
            out_specs=pl.BlockSpec((1, C_out, TL), lambda n, j: (n, 0, j)),
            scratch_shapes=[pltpu.VMEM((K * C_in, TL), compute_dtype)],
        ),
        compiler_params=pltpu.CompilerParams(
            # Both grid axes are independent -> shard across both v7x TensorCores.
            dimension_semantics=("parallel", "parallel"),
            vmem_limit_bytes=int(min(56 * 1024 * 1024,
                                     max(32 * 1024 * 1024, 2 * vmem_need(TL)))),
        ),
    )(w_fused, b2d, x_main, x_halo)
    return out[:, :, :L]


def _reference(x, weight, mask, bias, kernel_size):
    """Pure-JAX f32 reference matching F.conv1d(F.pad(x, pad), weight*mask, bias)."""
    K = kernel_size
    total_pad = K - 1
    left_pad = total_pad // 2
    x_pad = jnp.pad(x, ((0, 0), (0, 0), (left_pad, total_pad - left_pad)))
    w = weight if mask is None else weight * mask[:, :, None]
    out = jax.lax.conv_general_dilated(
        x_pad, w, window_strides=(1,), padding="VALID",
        dimension_numbers=("NCH", "OIH", "NCH"),
    )
    if bias is not None:
        out = out + bias[None, :, None]
    return out


if __name__ == "__main__":
    # small shapes: batch=2, in_channels=4, out_channels=6, length=16, kernel=3
    N, C_in, C_out, L, K = 2, 4, 6, 16, 3

    key = jax.random.PRNGKey(0)
    kx, kw, kb, km = jax.random.split(key, 4)

    init_k = np.sqrt(1.0 / (C_in * K))
    x = jax.random.normal(kx, (N, C_in, L), dtype=jnp.float32)
    weight = jax.random.uniform(
        kw, (C_out, C_in, K), minval=-init_k, maxval=init_k, dtype=jnp.float32
    )
    bias = jax.random.uniform(
        kb, (C_out,), minval=-init_k, maxval=init_k, dtype=jnp.float32
    )
    # deterministic binary channel mask (C_out, C_in)
    mask = (jax.random.uniform(km, (C_out, C_in)) > 0.5).astype(jnp.float32)

    out = efficient_masked_conv1d(x, weight, mask, bias, K)
    out = jax.block_until_ready(out)
    assert out.shape == (N, C_out, L) and out.dtype == x.dtype

    ref = _reference(x, weight, mask, bias, K)
    # bf16 MXU operands with f32 accumulation -> loosened tolerance vs f32 ref.
    np.testing.assert_allclose(np.asarray(out), np.asarray(ref), rtol=2e-2, atol=2e-2)

    print("KERNEL_OK")
</pallas_src>

<mosaic_0001>
module attributes {stable_mosaic.version = 11 : i64} {
  func.func @_masked_conv1d_kernel(%arg0: i32, %arg1: i32, %arg2: memref<6x12xbf16, #tpu.memory_space<vmem>>, %arg3: memref<6x1xf32, #tpu.memory_space<vmem>>, %arg4: memref<1x4x128xbf16, #tpu.memory_space<vmem>>, %arg5: memref<1x1x4x2xbf16, #tpu.memory_space<vmem>>, %arg6: memref<1x6x128xf32, #tpu.memory_space<vmem>>, %arg7: memref<12x128xbf16, #tpu.memory_space<vmem>>) attributes {dimension_semantics = [#tpu.dimension_semantics<parallel>, #tpu.dimension_semantics<parallel>], iteration_bounds = array<i64: 2, 1>, scalar_prefetch = 0 : i64, scratch_operands = 1 : i64, tpu.core_type = #tpu.core_type<tc>, window_params = [{pipeline_mode = #tpu.pipeline_mode<synchronous>, transform_indices = @transform_0, window_bounds = array<i64: 6, 12>}, {pipeline_mode = #tpu.pipeline_mode<synchronous>, transform_indices = @transform_1, window_bounds = array<i64: 6, 1>}, {transform_indices = @transform_2, window_bounds = array<i64: 1, 4, 128>}, {transform_indices = @transform_3, window_bounds = array<i64: 1, 1, 4, 2>}, {transform_indices = @transform_4, window_bounds = array<i64: 1, 6, 128>}]} {
    %c0 = arith.constant 0 : index
    %c0_0 = arith.constant 0 : index
    %c0_1 = arith.constant 0 : index
    %0 = vector.load %arg4[%c0, %c0_0, %c0_1] : memref<1x4x128xbf16, #tpu.memory_space<vmem>>, vector<1x4x128xbf16>
    %1 = vector.shape_cast %0 : vector<1x4x128xbf16> to vector<4x128xbf16>
    %c0_2 = arith.constant 0 : index
    %c0_3 = arith.constant 0 : index
    %2 = vector.load %arg7[%c0_2, %c0_3] : memref<12x128xbf16, #tpu.memory_space<vmem>>, vector<4x128xbf16>
    tpu.vector_store %arg7[%c0_2, %c0_3], %1 {strides = array<i32>} : memref<12x128xbf16, #tpu.memory_space<vmem>>, vector<4x128xbf16>,
    %c0_4 = arith.constant 0 : index
    %c0_5 = arith.constant 0 : index
    %c1 = arith.constant 1 : index
    %3 = vector.load %arg4[%c0_4, %c0_5, %c1] : memref<1x4x128xbf16, #tpu.memory_space<vmem>>, vector<1x4x127xbf16>
    %4 = vector.shape_cast %3 : vector<1x4x127xbf16> to vector<4x127xbf16>
    %c4 = arith.constant 4 : index
    %c0_6 = arith.constant 0 : index
    %5 = vector.load %arg7[%c4, %c0_6] : memref<12x128xbf16, #tpu.memory_space<vmem>>, vector<4x127xbf16>
    tpu.vector_store %arg7[%c4, %c0_6], %4 {strides = array<i32>} : memref<12x128xbf16, #tpu.memory_space<vmem>>, vector<4x127xbf16>,
    %c0_7 = arith.constant 0 : index
    %c0_8 = arith.constant 0 : index
    %c0_9 = arith.constant 0 : index
    %c0_10 = arith.constant 0 : index
    %6 = vector.load %arg5[%c0_7, %c0_8, %c0_9, %c0_10] : memref<1x1x4x2xbf16, #tpu.memory_space<vmem>>, vector<1x1x4x1xbf16>
    %7 = vector.shape_cast %6 : vector<1x1x4x1xbf16> to vector<4x1xbf16>
    %c4_11 = arith.constant 4 : index
    %c127 = arith.constant 127 : index
    %8 = vector.load %arg7[%c4_11, %c127] : memref<12x128xbf16, #tpu.memory_space<vmem>>, vector<4x1xbf16>
    tpu.vector_store %arg7[%c4_11, %c127], %7 {strides = array<i32>} : memref<12x128xbf16, #tpu.memory_space<vmem>>, vector<4x1xbf16>,
    %c0_12 = arith.constant 0 : index
    %c0_13 = arith.constant 0 : index
    %c2 = arith.constant 2 : index
    %9 = vector.load %arg4[%c0_12, %c0_13, %c2] : memref<1x4x128xbf16, #tpu.memory_space<vmem>>, vector<1x4x126xbf16>
    %10 = vector.shape_cast %9 : vector<1x4x126xbf16> to vector<4x126xbf16>
    %c8 = arith.constant 8 : index
    %c0_14 = arith.constant 0 : index
    %11 = vector.load %arg7[%c8, %c0_14] : memref<12x128xbf16, #tpu.memory_space<vmem>>, vector<4x126xbf16>
    tpu.vector_store %arg7[%c8, %c0_14], %10 {strides = array<i32>} : memref<12x128xbf16, #tpu.memory_space<vmem>>, vector<4x126xbf16>,
    %c0_15 = arith.constant 0 : index
    %c0_16 = arith.constant 0 : index
    %c0_17 = arith.constant 0 : index
    %c0_18 = arith.constant 0 : index
    %12 = vector.load %arg5[%c0_15, %c0_16, %c0_17, %c0_18] : memref<1x1x4x2xbf16, #tpu.memory_space<vmem>>, vector<1x1x4x2xbf16>
    %13 = vector.shape_cast %12 : vector<1x1x4x2xbf16> to vector<4x2xbf16>
    %c8_19 = arith.constant 8 : index
    %c126 = arith.constant 126 : index
    %14 = vector.load %arg7[%c8_19, %c126] : memref<12x128xbf16, #tpu.memory_space<vmem>>, vector<4x2xbf16>
    tpu.vector_store %arg7[%c8_19, %c126], %13 {strides = array<i32>} : memref<12x128xbf16, #tpu.memory_space<vmem>>, vector<4x2xbf16>,
    %c0_20 = arith.constant 0 : index
    %c0_21 = arith.constant 0 : index
    %15 = vector.load %arg2[%c0_20, %c0_21] : memref<6x12xbf16, #tpu.memory_space<vmem>>, vector<6x12xbf16>
    %c0_22 = arith.constant 0 : index
    %c0_23 = arith.constant 0 : index
    %16 = vector.load %arg7[%c0_22, %c0_23] : memref<12x128xbf16, #tpu.memory_space<vmem>>, vector<12x128xbf16>
    %cst = arith.constant dense<0.000000e+00> : vector<6x128xf32>
    %17 = tpu.matmul %15, %16, %cst {dimension_numbers = #tpu.dot_dimension_numbers<[1], [0], [0], [1], [0, 0, 1, 1], [], []>} : vector<6x12xbf16>, vector<12x128xbf16>, vector<6x128xf32> -> vector<6x128xf32>
    %c0_24 = arith.constant 0 : index
    %c0_25 = arith.constant 0 : index
    %18 = vector.load %arg3[%c0_24, %c0_25] : memref<6x1xf32, #tpu.memory_space<vmem>>, vector<6x1xf32>
    %19 = vector.broadcast %18 : vector<6x1xf32> to vector<6x128xf32>
    %20 = arith.addf %17, %19 : vector<6x128xf32>
    %c0_26 = arith.constant 0 : index
    %c0_27 = arith.constant 0 : index
    %c0_28 = arith.constant 0 : index
    %21 = vector.load %arg6[%c0_26, %c0_27, %c0_28] : memref<1x6x128xf32, #tpu.memory_space<vmem>>, vector<1x6x128xf32>
    %22 = vector.shape_cast %21 : vector<1x6x128xf32> to vector<6x128xf32>
    %23 = vector.shape_cast %20 : vector<6x128xf32> to vector<1x6x128xf32>
    tpu.vector_store %arg6[%c0_26, %c0_27, %c0_28], %23 {strides = array<i32>} : memref<1x6x128xf32, #tpu.memory_space<vmem>>, vector<1x6x128xf32>,
    return
  }
  func.func @transform_0(%arg0: i32, %arg1: i32) -> (i32, i32) {
    %c0_i32 = arith.constant 0 : i32
    %c0_i32_0 = arith.constant 0 : i32
    %c0_i32_1 = arith.constant 0 : i32
    return %c0_i32, %c0_i32_0 : i32, i32
  }
  func.func @transform_1(%arg0: i32, %arg1: i32) -> (i32, i32) {
    %c0_i32 = arith.constant 0 : i32
    %c0_i32_0 = arith.constant 0 : i32
    %c0_i32_1 = arith.constant 0 : i32
    return %c0_i32, %c0_i32_0 : i32, i32
  }
  func.func @transform_2(%arg0: i32, %arg1: i32) -> (i32, i32, i32) {
    %c0_i32 = arith.constant 0 : i32
    %c0_i32_0 = arith.constant 0 : i32
    return %arg0, %c0_i32, %arg1 : i32, i32, i32
  }
  func.func @transform_3(%arg0: i32, %arg1: i32) -> (i32, i32, i32, i32) {
    %c0_i32 = arith.constant 0 : i32
    %c0_i32_0 = arith.constant 0 : i32
    %c0_i32_1 = arith.constant 0 : i32
    return %arg0, %arg1, %c0_i32, %c0_i32_0 : i32, i32, i32, i32
  }
  func.func @transform_4(%arg0: i32, %arg1: i32) -> (i32, i32, i32) {
    %c0_i32 = arith.constant 0 : i32
    %c0_i32_0 = arith.constant 0 : i32
    return %arg0, %c0_i32, %arg1 : i32, i32, i32
  }
}

</mosaic_0001>

<llo_original>
// kernel: tpu_custom_call.1
$region0: #{tpu_custom_call.1}
  #allocation0 [shape = 'u32[]', space=smem, size = 0x4, offset = 0x4, fixed_abs, tag = 'smem constant byte address 0x4 - core index']
  #allocation1 [shape = 'u32[144,128]{1,0:T(1,128)}', space=vmem, size = 0x12000, scoped, tag = 'internal scratch']
  #allocation2 [shape = 'bf16[12,128]{1,0:T(8,128)(2,1)}', space=vmem, size = 0x1000, scoped, tag = 'scratch operand']
  %s0 = inlined_call_operand.vmem [shape: bf16[6,12], index: 0, kind: input, shape index: {}]
  %s1 = inlined_call_operand.vmem [shape: f32[6,1], index: 1, kind: input, shape index: {}]
  %s2 = inlined_call_operand.vmem [shape: bf16[2,4,128], index: 2, kind: input, shape index: {}]
  %s3 = inlined_call_operand.vmem [shape: bf16[2,1,4,2], index: 3, kind: input, shape index: {}]
  %s4 = inlined_call_operand.vmem [shape: f32[2,6,128], index: 4, kind: output, shape index: {}]
  %s5 = sld [smem:[#allocation0]]
  $region49: #{tpu_custom_call.1} parent=0
    _
  %s7 = ssub.s32 1, %s5
  %s8 = scalar_select 0, %s7, %s5
  loop: start=0, step=1, limit=4
  $region2: #{tpu_custom_call.1} parent=0 // loop_pre_header
    _
  $region3: #{tpu_custom_call.1} parent=0 // loop_header
    %s10 = sphi 0, %s14
    %p11 = scmp.ge.s32.totalorder %s10, 4
    %s17 = sphi 0, %s29
    %s18 = sphi 0, %s25
    %s19 = sphi 0, %s17
    %s20 = sphi 0, %s18
    %s21 = sphi 0, %s19
    %s22 = sphi 0, %s20
    %s30 = sphi 0, %s30
    %s32 = sphi 0, %s30
    %s33 = sphi 0, %s32
    %s47 = sphi 0, %s33
    %s51 = sphi 0, %s51
    %s53 = sphi 0, %s51
    %s54 = sphi 0, %s53
    %s68 = sphi 0, %s54
    %s76 = sphi 0, %s78
    %s79 = sphi 0, %s76
    %s80 = sphi 0, %s79
    %s96 = sphi 0, %s80
    %s104 = sphi 0, %s106
    %s107 = sphi 0, %s104
    %s108 = sphi 0, %s107
    %s124 = sphi 0, %s108
    %s132 = sphi 0, %s134
    %s135 = sphi 0, %s132
    %s136 = sphi 0, %s135
    %s152 = sphi 0, %s136
  $region4: #{tpu_custom_call.1} parent=0 // loop_header_branch
    %13 = sbr.rel (%p11) target = $region8
  $region5: #{tpu_custom_call.1} parent=0 // loop_body
    %s15 = ssub.s32 %s10, 1
    %s16 = ssub.s32 %s10, 2
    %s23 = sadd.s32 1, %s18
    %p24 = scmp.ge.s32.totalorder %s23, 1
    %s25 = scalar_select %p24, 0, %s23
    %s26 = sadd.s32 1, %s17
    %s27 = scalar_select %p24, %s26, %s17
    %p28 = scmp.ge.s32.totalorder %s27, 2
    %s29 = scalar_select %p28, 0, %s27
    %s31 = sadd.s32 %s30, 1
    %p34 = scmp.eq.s32.totalorder %s10, 1
    %p35 = scmp.ne.s32.totalorder %s30, %s32
    %p36 = scmp.eq.s32.totalorder %s10, 0
    %p37 = por %p35, %p36
    %p38 = scmp.ne.s32.totalorder %s30, %s32
    %p39 = scmp.eq.s32.totalorder %s15, 1
    %p40 = por %p38, %p39
    %p41 = scmp.ne.s32.totalorder %s32, %s33
    %p42 = scmp.eq.s32.totalorder %s15, 0
    %p43 = por %p41, %p42
    %p44 = scmp.ne.s32.totalorder %s32, %s33
    %p45 = scmp.eq.s32.totalorder %s16, 1
    %p46 = por %p44, %p45
    %p48 = scmp.ne.s32.totalorder %s33, %s47
    %p49 = scmp.eq.s32.totalorder %s16, 0
    %p50 = por %p48, %p49
    %s52 = sadd.s32 %s51, 1
    %p55 = scmp.eq.s32.totalorder %s10, 1
    %p56 = scmp.ne.s32.totalorder %s51, %s53
    %p57 = scmp.eq.s32.totalorder %s10, 0
    %p58 = por %p56, %p57
    %p59 = scmp.ne.s32.totalorder %s51, %s53
    %p60 = scmp.eq.s32.totalorder %s15, 1
    %p61 = por %p59, %p60
    %p62 = scmp.ne.s32.totalorder %s53, %s54
    %p63 = scmp.eq.s32.totalorder %s15, 0
    %p64 = por %p62, %p63
    %p65 = scmp.ne.s32.totalorder %s53, %s54
    %p66 = scmp.eq.s32.totalorder %s16, 1
    %p67 = por %p65, %p66
    %p69 = scmp.ne.s32.totalorder %s54, %s68
    %p70 = scmp.eq.s32.totalorder %s16, 0
    %p71 = por %p69, %p70
    %s72 = ssub.s32 %s17, %s29
    %s73 = ssub.s32 %s18, %s25
    %s74 = sor.u32 %s72, %s73
    %p75 = scmp.eq.s32.totalorder %s74, 0
    %s77 = sadd.s32 %s76, 1
    %s78 = scalar_select %p75, %s76, %s77
    %p81 = pneg %p75
    %p82 = scmp.eq.s32.totalorder %s10, 1
    %p83 = por %p81, %p82
    %p84 = scmp.ne.s32.totalorder %s76, %s79
    %p85 = scmp.eq.s32.totalorder %s10, 0
    %p86 = por %p84, %p85
    %p87 = scmp.ne.s32.totalorder %s76, %s79
    %p88 = scmp.eq.s32.totalorder %s15, 1
    %p89 = por %p87, %p88
    %p90 = scmp.ne.s32.totalorder %s79, %s80
    %p91 = scmp.eq.s32.totalorder %s15, 0
    %p92 = por %p90, %p91
    %p93 = scmp.ne.s32.totalorder %s79, %s80
    %p94 = scmp.eq.s32.totalorder %s16, 1
    %p95 = por %p93, %p94
    %p97 = scmp.ne.s32.totalorder %s80, %s96
    %p98 = scmp.eq.s32.totalorder %s16, 0
    %p99 = por %p97, %p98
    %s100 = ssub.s32 %s17, %s29
    %s101 = ssub.s32 %s18, %s25
    %s102 = sor.u32 %s100, %s101
    %p103 = scmp.eq.s32.totalorder %s102, 0
    %s105 = sadd.s32 %s104, 1
    %s106 = scalar_select %p103, %s104, %s105
    %p109 = pneg %p103
    %p110 = scmp.eq.s32.totalorder %s10, 1
    %p111 = por %p109, %p110
    %p112 = scmp.ne.s32.totalorder %s104, %s107
    %p113 = scmp.eq.s32.totalorder %s10, 0
    %p114 = por %p112, %p113
    %p115 = scmp.ne.s32.totalorder %s104, %s107
    %p116 = scmp.eq.s32.totalorder %s15, 1
    %p117 = por %p115, %p116
    %p118 = scmp.ne.s32.totalorder %s107, %s108
    %p119 = scmp.eq.s32.totalorder %s15, 0
    %p120 = por %p118, %p119
    %p121 = scmp.ne.s32.totalorder %s107, %s108
    %p122 = scmp.eq.s32.totalorder %s16, 1
    %p123 = por %p121, %p122
    %p125 = scmp.ne.s32.totalorder %s108, %s124
    %p126 = scmp.eq.s32.totalorder %s16, 0
    %p127 = por %p125, %p126
    %s128 = ssub.s32 %s17, %s29
    %s129 = ssub.s32 %s18, %s25
    %s130 = sor.u32 %s128, %s129
    %p131 = scmp.eq.s32.totalorder %s130, 0
    %s133 = sadd.s32 %s132, 1
    %s134 = scalar_select %p131, %s132, %s133
    %p137 = pneg %p131
    %p138 = scmp.eq.s32.totalorder %s10, 1
    %p139 = por %p137, %p138
    %p140 = scmp.ne.s32.totalorder %s132, %s135
    %p141 = scmp.eq.s32.totalorder %s10, 0
    %p142 = por %p140, %p141
    %p143 = scmp.ne.s32.totalorder %s132, %s135
    %p144 = scmp.eq.s32.totalorder %s15, 1
    %p145 = por %p143, %p144
    %p146 = scmp.ne.s32.totalorder %s135, %s136
    %p147 = scmp.eq.s32.totalorder %s15, 0
    %p148 = por %p146, %p147
    %p149 = scmp.ne.s32.totalorder %s135, %s136
    %p150 = scmp.eq.s32.totalorder %s16, 1
    %p151 = por %p149, %p150
    %p153 = scmp.ne.s32.totalorder %s136, %s152
    %p154 = scmp.eq.s32.totalorder %s16, 0
    %p155 = por %p153, %p154
    %p156 = scmp.le.s32.totalorder 1, %s10
    %p157 = scmp.lt.s32.totalorder %s10, 3
    %p158 = pnand %p156, %p157
    %p159 = pneg %p158
    // Predicated region
    $region9: #{tpu_custom_call.1} parent=5 // pred_check
      _
    $region10: #{tpu_custom_call.1} parent=5 // pred_check_branch
      %161 = sbr.rel (%p158) target = $region12
    $region11: #{tpu_custom_call.1} parent=5 // pred_region
      %s162 = ssub.s32 %s10, 1
      // Predicated region
      $region13: #{tpu_custom_call.1} parent=11 // pred_check
        %p163 = pneg %p43
      $region14: #{tpu_custom_call.1} parent=11 // pred_check_branch
        %165 = sbr.rel (%p163) target = $region16
      $region15: #{tpu_custom_call.1} parent=11 // pred_region
        _
      $region16: #{tpu_custom_call.1} parent=11 // pred_fallthru
        _
      // Predicated region
      $region17: #{tpu_custom_call.1} parent=11 // pred_check
        %p166 = pneg %p64
      $region18: #{tpu_custom_call.1} parent=11 // pred_check_branch
        %168 = sbr.rel (%p166) target = $region20
      $region19: #{tpu_custom_call.1} parent=11 // pred_region
        _
      $region20: #{tpu_custom_call.1} parent=11 // pred_fallthru
        _
    $region12: #{tpu_custom_call.1} parent=5 // pred_fallthru
      _
    %p169 = scmp.lt.s32.totalorder %s10, 2
    // Predicated region
    $region21: #{tpu_custom_call.1} parent=5 // pred_check
      %p170 = pneg %p169
    $region22: #{tpu_custom_call.1} parent=5 // pred_check_branch
      %172 = sbr.rel (%p170) target = $region24
    $region23: #{tpu_custom_call.1} parent=5 // pred_region
      // Predicated region
      $region25: #{tpu_custom_call.1} parent=23 // pred_check
        %p173 = pneg %p86
      $region26: #{tpu_custom_call.1} parent=23 // pred_check_branch
        %175 = sbr.rel (%p173) target = $region28
      $region27: #{tpu_custom_call.1} parent=23 // pred_region
        %p176 = scmp.lt.s32.totalorder %s17, 1
        %s177 = scalar_select %p176, %s17, 1
        %p178 = scmp.lt.s32.totalorder %s18, 0
        %s179 = scalar_select %p178, %s18, 0
        %s180 = sadd.s32 %s179, %s177
        %s181 = smul.addr %s180, 2
        %s182 = scalar_lea.vmem %s2, %s181
      $region28: #{tpu_custom_call.1} parent=23 // pred_fallthru
        _
      // Predicated region
      $region29: #{tpu_custom_call.1} parent=23 // pred_check
        %p183 = pneg %p114
      $region30: #{tpu_custom_call.1} parent=23 // pred_check_branch
        %185 = sbr.rel (%p183) target = $region32
      $region31: #{tpu_custom_call.1} parent=23 // pred_region
        %p186 = scmp.lt.s32.totalorder %s17, 1
        %s187 = scalar_select %p186, %s17, 1
        %p188 = scmp.lt.s32.totalorder %s18, 0
        %s189 = scalar_select %p188, %s18, 0
        %s190 = sadd.s32 %s189, %s187
        %s191 = smul.addr %s190, 2
        %s192 = scalar_lea.vmem %s3, %s191
      $region32: #{tpu_custom_call.1} parent=23 // pred_fallthru
        _
    $region24: #{tpu_custom_call.1} parent=5 // pred_fallthru
      _
    %p193 = scmp.le.s32.totalorder 1, %s10
    %p194 = scmp.lt.s32.totalorder %s10, 3
    %p195 = pnand %p193, %p194
    %p196 = pneg %p195
    // Predicated region
    $region33: #{tpu_custom_call.1} parent=5 // pred_check
      _
    $region34: #{tpu_custom_call.1} parent=5 // pred_check_branch
      %198 = sbr.rel (%p195) target = $region36
    $region35: #{tpu_custom_call.1} parent=5 // pred_region
      %s199 = ssub.s32 %s10, 1
      %p200 = pneg %p43
      %p201 = pneg %p40
      %p202 = pneg %p64
      %p203 = pneg %p61
      %p204 = scmp.lt.s32.totalorder %s19, 1
      %s205 = scalar_select %p204, %s19, 1
      %p206 = scmp.lt.s32.totalorder %s20, 0
      %s207 = scalar_select %p206, %s20, 0
      %s208 = sadd.s32 %s207, %s205
      %s209 = smul.addr %s208, 2
      %s210 = scalar_lea.vmem %s2, %s209
      %p211 = pneg %p92
      %p212 = pneg %p89
      %p213 = scmp.lt.s32.totalorder %s19, 1
      %s214 = scalar_select %p213, %s19, 1
      %p215 = scmp.lt.s32.totalorder %s20, 0
      %s216 = scalar_select %p215, %s20, 0
      %s217 = sadd.s32 %s216, %s214
      %s218 = smul.addr %s217, 2
      %s219 = scalar_lea.vmem %s3, %s218
      %p220 = pneg %p120
      %p221 = pneg %p117
      %p222 = pneg %p148
      %p223 = pneg %p145
      %p224 = scmp.lt.s32.totalorder %s19, 1
      %s225 = scalar_select %p224, %s19, 1
      %p226 = scmp.lt.s32.totalorder %s20, 0
      %s227 = scalar_select %p226, %s20, 0
      %s228 = sadd.s32 %s227, %s225
      %s229 = smul.addr %s228, 8
      %s230 = scalar_lea.vmem %s4, %s229
      %p231 = scmp.lt.s32.totalorder %s19, 1
      %s232 = scalar_select %p231, %s19, 1
      %p233 = scmp.lt.s32.totalorder %s20, 0
      %s234 = scalar_select %p233, %s20, 0
      %s235 = sadd.s32 %s234, %s232
      %s236 = smul.addr %s235, 2
      %s237 = scalar_lea.vmem %s2, %s236
      %p238 = scmp.lt.s32.totalorder %s19, 1
      %s239 = scalar_select %p238, %s19, 1
      %p240 = scmp.lt.s32.totalorder %s20, 0
      %s241 = scalar_select %p240, %s20, 0
      %s242 = sadd.s32 %s241, %s239
      %s243 = smul.addr %s242, 2
      %s244 = scalar_lea.vmem %s3, %s243
      %p245 = scmp.lt.s32.totalorder %s19, 1
      %s246 = scalar_select %p245, %s19, 1
      %p247 = scmp.lt.s32.totalorder %s20, 0
      %s248 = scalar_select %p247, %s20, 0
      %s249 = sadd.s32 %s248, %s246
      %s250 = smul.addr %s249, 8
      %s251 = scalar_lea.vmem %s4, %s250
      %v253 = vld [vmem:[%s237] sm:$0x3]
      %254 = vst [vmem:[#allocation2] sm:$0x3] %v253
      %v255 = vld [vmem:[%s237] sm:$0x3]
      %v257 = vcombine.low %v255, %v255
      %v259 = vunpack.c.l.s4 1983009808
      %v260 = vunpack.c.0.s8 %v259
      %v261 = vlaneseq
      %v262 = vshrl.u32 %v261, 7
      %v263 = vsub.s32 %v260, %v262
      %v264 = vrot.slane %v257, %v263
      %265 = vrot.lane.b32.xlu0 %v264, 127
      %v266 = vpop.permute.xlu0 %265
      %vm268 = vcmask 1035266
      %269 = vst.msk [vmem:[#allocation2] sm:$0xc] %vm268, %v266
      %v270 = vld [vmem:[%s244] sm:$0x3]
      %v272 = vcombine.low %v270, %v270
      %v274 = vunpack.c.l.s4 1983009808
      %v275 = vunpack.c.0.s8 %v274
      %v276 = vlaneseq
      %v277 = vshrl.u32 %v276, 7
      %v278 = vsub.s32 %v275, %v277
      %v279 = vrot.slane %v272, %v278
      %280 = vrot.lane.b32.xlu0 %v279, 127
      %v281 = vpop.permute.xlu0 %280
      %vm283 = vcmask 1044474
      %284 = vst.msk [vmem:[#allocation2] sm:$0xc] %vm283, %v281
      %v285 = vld [vmem:[%s237] sm:$0x3]
      %v288 = vunpack.c.l.s4 1983009808
      %v289 = vunpack.c.0.s8 %v288
      %v290 = vlaneseq
      %v291 = vshrl.u32 %v290, 7
      %v292 = vsub.s32 %v289, %v291
      %v293 = vrot.slane %v285, %v292
      %294 = vrot.lane.b32.xlu0 %v293, 126
      %v295 = vpop.permute.xlu0 %294
      %vm297 = vcmask 1025024
      %298 = vst.msk [vmem:[#allocation2 + $0x4] sm:$0x3] %vm297, %v295
      %v299 = vld [vmem:[%s244] sm:$0x3]
      %v302 = vunpack.c.l.s4 1983009808
      %v303 = vunpack.c.0.s8 %v302
      %v304 = vlaneseq
      %v305 = vshrl.u32 %v304, 7
      %v306 = vsub.s32 %v303, %v305
      %v307 = vrot.slane %v299, %v306
      %308 = vrot.lane.b32.xlu0 %v307, 126
      %v309 = vpop.permute.xlu0 %308
      %vm311 = vcmask 1042416
      %312 = vst.msk [vmem:[#allocation2 + $0x4] sm:$0x3] %vm311, %v309
      %v313 = vld [vmem:[%s0] sm:$0x7]
      %v314 = vld [vmem:[#allocation2] sm:$0xf]
      %v315 = vld [vmem:[#allocation2 + $0x4] sm:$0x3]
      %v316 = vld [vmem:[%s1] sm:$0x3f]
      %318 = vset.pattern.permute.xlu0 0
      %319 = vperm.xlu0 %318, %v316
      %v320 = vpop.permute.xlu0 %319
      %v324 = vunpack.c.l.b16 %v314
      %v325 = vunpack.c.l.b16 %v315
      %v326 = vpack.c.b16 %v325, %v324
      %vm327 = vcmask 97280
      %v329 = vsel %vm327, %v313, 0
      %vm331 = vcmask 1045504
      %v333 = vsel %vm331, %v326, 0
      %335 = vmatprep.subr.bf16.mxu0 0
      %336 = vmatpush1.bf16.msra.mxu0 0
      %337 = vmatprep.subr.bf16.mxu0 0
      %338 = vmatpush1.bf16.msra.mxu0 0
      %339 = vmatprep.subr.bf16.mxu0 0
      %340 = vmatpush1.bf16.msra.mxu0 0
      %341 = vmatprep.subr.bf16.mxu0 0
      %342 = vmatpush1.bf16.msra.mxu0 0
      %343 = vmatprep.subr.bf16.mxu0 0
      %344 = vmatpush1.bf16.msra.mxu0 0
      %345 = vmatprep.subr.bf16.mxu0 0
      %346 = vmatpush1.bf16.msra.mxu0 0
      %347 = vmatprep.subr.bf16.mxu0 0
      %348 = vmatpush1.bf16.msra.mxu0 0
      %349 = vmatprep.subr.bf16.mxu0 0
      %350 = vmatpush1.bf16.msra.mxu0 %v333
      %351 = vmatprep.subr.bf16.mxu0 0
      %352 = vmatpush2.bf16.msra.mxu0 0
      %353 = vmatprep.subr.bf16.mxu0 0
      %354 = vmatpush2.bf16.msra.mxu0 0
      %355 = vmatprep.subr.bf16.mxu0 0
      %356 = vmatpush2.bf16.msra.mxu0 0
      %357 = vmatprep.subr.bf16.mxu0 0
      %358 = vmatpush2.bf16.msra.mxu0 0
      %359 = vmatprep.subr.bf16.mxu0 0
      %360 = vmatpush2.bf16.msra.mxu0 0
      %361 = vmatprep.subr.bf16.mxu0 0
      %362 = vmatpush2.bf16.msra.mxu0 0
      %363 = vmatprep.subr.bf16.mxu0 0
      %364 = vmatpush2.bf16.msra.mxu0 0
      %365 = vmatprep.subr.bf16.mxu0 0
      %366 = vmatpush2.bf16.msra.mxu0 0
      %367 = vmatprep.mubr.bf16.mxu0 0
      %368 = vmatmul.mubr.bf16.gmra.mxu0 %v329
      %v369 = vpop.f32.mrf.mxu0
      %v370 = vadd.f32 %v320, %v369
      %v371 = vpop.f32.mrf.mxu0
      %v372 = vpop.f32.mrf.mxu0
      %v373 = vpop.f32.mrf.mxu0
      %374 = vdwg.mxu0
      %375 = vst [vmem:[%s251] sm:$0x3f] %v370
      %p376 = scmp.lt.s32.totalorder %s19, 1
      %s377 = scalar_select %p376, %s19, 1
      %p378 = scmp.lt.s32.totalorder %s20, 0
      %s379 = scalar_select %p378, %s20, 0
      %s380 = sadd.s32 %s379, %s377
      %s381 = smul.addr %s380, 8
      %s382 = scalar_lea.vmem %s4, %s381
      // Predicated region
      $region37: #{tpu_custom_call.1} parent=35 // pred_check
        %p383 = pneg %p145
      $region38: #{tpu_custom_call.1} parent=35 // pred_check_branch
        %385 = sbr.rel (%p383) target = $region40
      $region39: #{tpu_custom_call.1} parent=35 // pred_region
        _
      $region40: #{tpu_custom_call.1} parent=35 // pred_fallthru
        _
    $region36: #{tpu_custom_call.1} parent=5 // pred_fallthru
      _
    %p386 = scmp.le.s32.totalorder 2, %s10
    // Predicated region
    $region41: #{tpu_custom_call.1} parent=5 // pred_check
      %p387 = pneg %p386
    $region42: #{tpu_custom_call.1} parent=5 // pred_check_branch
      %389 = sbr.rel (%p387) target = $region44
    $region43: #{tpu_custom_call.1} parent=5 // pred_region
      %s390 = ssub.s32 %s10, 2
      // Predicated region
      $region45: #{tpu_custom_call.1} parent=43 // pred_check
        %p391 = pneg %p151
      $region46: #{tpu_custom_call.1} parent=43 // pred_check_branch
        %393 = sbr.rel (%p391) target = $region48
      $region47: #{tpu_custom_call.1} parent=43 // pred_region
        %p394 = scmp.lt.s32.totalorder %s21, 1
        %s395 = scalar_select %p394, %s21, 1
        %p396 = scmp.lt.s32.totalorder %s22, 0
        %s397 = scalar_select %p396, %s22, 0
        %s398 = sadd.s32 %s397, %s395
        %s399 = smul.addr %s398, 8
        %s400 = scalar_lea.vmem %s4, %s399
      $region48: #{tpu_custom_call.1} parent=43 // pred_fallthru
        _
    $region44: #{tpu_custom_call.1} parent=5 // pred_fallthru
      _
  $region6: #{tpu_custom_call.1} parent=0 // loop_footer
    %s14 = sadd.s32 1, %s10
  $region7: #{tpu_custom_call.1} parent=0 // loop_footer_branch
    %9 = sbr.rel target = $region3
  $region8: #{tpu_custom_call.1} parent=0 // loop_exit
    _

</llo_original>
